<compile_context>
chip_gen: v7x
topology: tpu7x:2x2x1
jax: 0.10.0
libtpu: 0.0.40
codegen_flags: <defaults>
</compile_context>

<pallas_src>
import jax
import jax.numpy as jnp
from jax.experimental import pallas as pl
from jax.experimental.pallas import tpu as pltpu


# ---- module hyper-parameters (SigmoidBin defaults) --------------------------
BIN_COUNT = 10
LENGTH = BIN_COUNT + 1          # channel 0 = regression logit, 1..10 = bin logits
VMIN = 0.0
VMAX = 1.0
SCALE = float(VMAX - VMIN)
STEP = SCALE / BIN_COUNT
REG_SCALE = 2.0
USE_FW_REGRESSION = True

# torch.range(start, end + 1e-4, step) -> start + i*step, i = 0..bin_count-1
_BIN_START = VMIN + SCALE / 2.0 / BIN_COUNT
BIN_VALUES = tuple(float(_BIN_START + STEP * i) for i in range(BIN_COUNT))  # baked in
BINS = jnp.asarray(BIN_VALUES, dtype=jnp.float32)                          # ref only

_LANES = 128
_SUBLANES = 8
_GRANULE = _SUBLANES * _LANES        # 1024: minimum row-padding granule
_MIN_GRID_STEPS = 8                  # let v7x's 2 TensorCores both get work
_MIN_TILE = 8 * _GRANULE             # never shrink tiles into the per-step-overhead cliff


def _round_up(x, m):
    return ((x + m - 1) // m) * m


# ---- Pallas kernel -----------------------------------------------------------
def _sigmoid_bin_fwd_kernel(pred_ref, out_ref):
    # pred_ref: (LENGTH, R, 128) channel-major, vreg-dense; out_ref: (R, 128) f32.
    # Regression branch (f32): (pred[0] * reg_scale - reg_scale/2) * step
    pred_reg = (pred_ref[0].astype(jnp.float32) * REG_SCALE - REG_SCALE / 2.0) * STEP

    # Classification branch: unrolled running max over the 10 bin logits in the
    # native dtype (bf16 compares hit the bf16 VALU on v6e/v7x); the bin center
    # of the current best is carried in f32.  Strict '>' keeps the first max on
    # ties, matching argmax semantics for finite inputs.
    best_val = pred_ref[1]                                         # (R, 128) native dtype
    best_bias = jnp.full(best_val.shape, BIN_VALUES[0], dtype=jnp.float32)
    for k in range(1, BIN_COUNT):
        v = pred_ref[1 + k]
        take = v > best_val
        best_val = jnp.where(take, v, best_val)
        best_bias = jnp.where(take, jnp.float32(BIN_VALUES[k]), best_bias)

    result = pred_reg + best_bias if USE_FW_REGRESSION else best_bias
    out_ref[...] = jnp.clip(result, VMIN, VMAX)


# ---- wrappers ----------------------------------------------------------------
def sigmoid_bin_forward_channel_major(pred_t, n=None, *, tile_n=131072):
    """pred_t: [LENGTH, N] channel-major -> [n] float32 (n defaults to N).

    Fast path: no transpose, no extra HBM pass.  N is padded to a multiple of
    1024 only if needed; pad-region values never reach the returned slice.
    """
    length, n_cols = pred_t.shape
    assert length == LENGTH, (length, LENGTH)
    if n is None:
        n = n_cols
    if n == 0:
        return jnp.zeros((0,), dtype=jnp.float32)

    n_pad = _round_up(n_cols, _GRANULE)
    if n_pad != n_cols:
        pred_t = jnp.pad(pred_t, ((0, 0), (0, n_pad - n_cols)))

    # vreg-dense 3D view: contiguous split of the last dim (free).
    rows = n_pad // _LANES
    pred3d = pred_t.reshape(LENGTH, rows, _LANES)

    # Tile selection: as big as tile_n allows, but (a) never below the 1024
    # granule, (b) capped so big problems keep >= _MIN_GRID_STEPS grid steps.
    tile = min(_round_up(tile_n, _GRANULE), n_pad)
    if n_pad // tile < _MIN_GRID_STEPS and n_pad >= _MIN_GRID_STEPS * _MIN_TILE:
        tile = max(_MIN_TILE, _round_up(pl.cdiv(n_pad, _MIN_GRID_STEPS), _GRANULE))
    tile_rows = tile // _LANES
    grid = pl.cdiv(rows, tile_rows)     # ragged last block handled by Pallas

    out = pl.pallas_call(
        _sigmoid_bin_fwd_kernel,
        out_shape=jax.ShapeDtypeStruct((rows, _LANES), jnp.float32),
        grid_spec=pltpu.PrefetchScalarGridSpec(
            num_scalar_prefetch=0,
            grid=(grid,),
            in_specs=[pl.BlockSpec((LENGTH, tile_rows, _LANES),
                                   lambda i: (0, i, 0))],
            out_specs=pl.BlockSpec((tile_rows, _LANES), lambda i: (i, 0)),
        ),
        compiler_params=pltpu.CompilerParams(
            dimension_semantics=("parallel",),
            vmem_limit_bytes=32 * 1024 * 1024,
        ),
    )(pred3d)
    return out.reshape(-1)[:n]


def sigmoid_bin_forward(pred, *, tile_n=131072):
    """pred: float array [..., LENGTH] -> result: float32 array [...]."""
    assert pred.shape[-1] == LENGTH, (pred.shape[-1], LENGTH)
    lead_shape = pred.shape[:-1]
    n = 1
    for d in lead_shape:
        n *= d
    if n == 0:                                      # empty-input guard
        return jnp.zeros(lead_shape, dtype=jnp.float32)

    pred2d = pred.reshape(n, LENGTH)
    if pred2d.dtype not in (jnp.float32, jnp.bfloat16):
        pred2d = pred2d.astype(jnp.float32)

    n_pad = _round_up(n, _GRANULE)                  # pad only to the vreg granule
    if n_pad != n:
        pred2d = jnp.pad(pred2d, ((0, n_pad - n), (0, 0)))

    # One fused pad+cast+transpose copy (see layout note); producers that can
    # emit channel-major logits should call sigmoid_bin_forward_channel_major.
    pred_t = pred2d.T                               # (LENGTH, n_pad)

    out = sigmoid_bin_forward_channel_major(pred_t, n, tile_n=tile_n)
    return out.reshape(lead_shape)


# ---- pure-JAX reference (mirrors the PyTorch forward) ------------------------
def sigmoid_bin_forward_ref(pred):
    pred = pred.astype(jnp.float32)
    pred_reg = (pred[..., 0] * REG_SCALE - REG_SCALE / 2.0) * STEP
    pred_bin = pred[..., 1:1 + BIN_COUNT]
    bin_idx = jnp.argmax(pred_bin, axis=-1)
    bin_bias = BINS[bin_idx]
    result = pred_reg + bin_bias if USE_FW_REGRESSION else bin_bias
    return jnp.clip(result, VMIN, VMAX)


# TODO(synk): training_loss (BCEWithLogitsLoss + MSELoss path) is not implemented
# as a kernel; only the forward pass is.

if __name__ == "__main__":
    key = jax.random.PRNGKey(0)
    # batch=2, anchors=8, channels=LENGTH=11 (small demo shape)
    pred = jax.random.normal(key, (2, 8, LENGTH), dtype=jnp.float32)

    out = jax.block_until_ready(sigmoid_bin_forward(pred))
    ref = sigmoid_bin_forward_ref(pred)

    assert out.shape == pred.shape[:-1], (out.shape, pred.shape[:-1])
    assert jnp.allclose(out, ref, atol=1e-6, rtol=1e-6), "mismatch vs reference"

    print("KERNEL_OK")
</pallas_src>

<mosaic_0001>
module attributes {stable_mosaic.version = 11 : i64} {
  func.func @_sigmoid_bin_fwd_kernel(%arg0: i32, %arg1: memref<11x8x128xf32, #tpu.memory_space<vmem>>, %arg2: memref<8x128xf32, #tpu.memory_space<vmem>>) attributes {dimension_semantics = [#tpu.dimension_semantics<parallel>], iteration_bounds = array<i64: 1>, scalar_prefetch = 0 : i64, scratch_operands = 0 : i64, tpu.core_type = #tpu.core_type<tc>, window_params = [{transform_indices = @transform_0, window_bounds = array<i64: 11, 8, 128>}, {transform_indices = @transform_1, window_bounds = array<i64: 8, 128>}]} {
    %c0 = arith.constant 0 : index
    %c0_0 = arith.constant 0 : index
    %c0_1 = arith.constant 0 : index
    %0 = vector.load %arg1[%c0, %c0_0, %c0_1] : memref<11x8x128xf32, #tpu.memory_space<vmem>>, vector<1x8x128xf32>
    %1 = vector.shape_cast %0 : vector<1x8x128xf32> to vector<8x128xf32>
    %cst = arith.constant 2.000000e+00 : f32
    %2 = vector.broadcast %cst : f32 to vector<8x128xf32>
    %3 = arith.mulf %1, %2 : vector<8x128xf32>
    %cst_2 = arith.constant 1.000000e+00 : f32
    %4 = vector.broadcast %cst_2 : f32 to vector<8x128xf32>
    %5 = arith.subf %3, %4 : vector<8x128xf32>
    %cst_3 = arith.constant 1.000000e-01 : f32
    %6 = vector.broadcast %cst_3 : f32 to vector<8x128xf32>
    %7 = arith.mulf %5, %6 : vector<8x128xf32>
    %c1 = arith.constant 1 : index
    %c0_4 = arith.constant 0 : index
    %c0_5 = arith.constant 0 : index
    %8 = vector.load %arg1[%c1, %c0_4, %c0_5] : memref<11x8x128xf32, #tpu.memory_space<vmem>>, vector<1x8x128xf32>
    %9 = vector.shape_cast %8 : vector<1x8x128xf32> to vector<8x128xf32>
    %cst_6 = arith.constant 5.000000e-02 : f32
    %10 = vector.broadcast %cst_6 : f32 to vector<8x128xf32>
    %c2 = arith.constant 2 : index
    %c0_7 = arith.constant 0 : index
    %c0_8 = arith.constant 0 : index
    %11 = vector.load %arg1[%c2, %c0_7, %c0_8] : memref<11x8x128xf32, #tpu.memory_space<vmem>>, vector<1x8x128xf32>
    %12 = vector.shape_cast %11 : vector<1x8x128xf32> to vector<8x128xf32>
    %13 = arith.cmpf ogt, %12, %9 : vector<8x128xf32>
    %14 = arith.select %13, %12, %9 : vector<8x128xi1>, vector<8x128xf32>
    %cst_9 = arith.constant 1.500000e-01 : f32
    %15 = vector.broadcast %cst_9 : f32 to vector<8x128xf32>
    %16 = arith.select %13, %15, %10 : vector<8x128xi1>, vector<8x128xf32>
    %c3 = arith.constant 3 : index
    %c0_10 = arith.constant 0 : index
    %c0_11 = arith.constant 0 : index
    %17 = vector.load %arg1[%c3, %c0_10, %c0_11] : memref<11x8x128xf32, #tpu.memory_space<vmem>>, vector<1x8x128xf32>
    %18 = vector.shape_cast %17 : vector<1x8x128xf32> to vector<8x128xf32>
    %19 = arith.cmpf ogt, %18, %14 : vector<8x128xf32>
    %20 = arith.select %19, %18, %14 : vector<8x128xi1>, vector<8x128xf32>
    %cst_12 = arith.constant 2.500000e-01 : f32
    %21 = vector.broadcast %cst_12 : f32 to vector<8x128xf32>
    %22 = arith.select %19, %21, %16 : vector<8x128xi1>, vector<8x128xf32>
    %c4 = arith.constant 4 : index
    %c0_13 = arith.constant 0 : index
    %c0_14 = arith.constant 0 : index
    %23 = vector.load %arg1[%c4, %c0_13, %c0_14] : memref<11x8x128xf32, #tpu.memory_space<vmem>>, vector<1x8x128xf32>
    %24 = vector.shape_cast %23 : vector<1x8x128xf32> to vector<8x128xf32>
    %25 = arith.cmpf ogt, %24, %20 : vector<8x128xf32>
    %26 = arith.select %25, %24, %20 : vector<8x128xi1>, vector<8x128xf32>
    %cst_15 = arith.constant 3.500000e-01 : f32
    %27 = vector.broadcast %cst_15 : f32 to vector<8x128xf32>
    %28 = arith.select %25, %27, %22 : vector<8x128xi1>, vector<8x128xf32>
    %c5 = arith.constant 5 : index
    %c0_16 = arith.constant 0 : index
    %c0_17 = arith.constant 0 : index
    %29 = vector.load %arg1[%c5, %c0_16, %c0_17] : memref<11x8x128xf32, #tpu.memory_space<vmem>>, vector<1x8x128xf32>
    %30 = vector.shape_cast %29 : vector<1x8x128xf32> to vector<8x128xf32>
    %31 = arith.cmpf ogt, %30, %26 : vector<8x128xf32>
    %32 = arith.select %31, %30, %26 : vector<8x128xi1>, vector<8x128xf32>
    %cst_18 = arith.constant 4.500000e-01 : f32
    %33 = vector.broadcast %cst_18 : f32 to vector<8x128xf32>
    %34 = arith.select %31, %33, %28 : vector<8x128xi1>, vector<8x128xf32>
    %c6 = arith.constant 6 : index
    %c0_19 = arith.constant 0 : index
    %c0_20 = arith.constant 0 : index
    %35 = vector.load %arg1[%c6, %c0_19, %c0_20] : memref<11x8x128xf32, #tpu.memory_space<vmem>>, vector<1x8x128xf32>
    %36 = vector.shape_cast %35 : vector<1x8x128xf32> to vector<8x128xf32>
    %37 = arith.cmpf ogt, %36, %32 : vector<8x128xf32>
    %38 = arith.select %37, %36, %32 : vector<8x128xi1>, vector<8x128xf32>
    %cst_21 = arith.constant 5.500000e-01 : f32
    %39 = vector.broadcast %cst_21 : f32 to vector<8x128xf32>
    %40 = arith.select %37, %39, %34 : vector<8x128xi1>, vector<8x128xf32>
    %c7 = arith.constant 7 : index
    %c0_22 = arith.constant 0 : index
    %c0_23 = arith.constant 0 : index
    %41 = vector.load %arg1[%c7, %c0_22, %c0_23] : memref<11x8x128xf32, #tpu.memory_space<vmem>>, vector<1x8x128xf32>
    %42 = vector.shape_cast %41 : vector<1x8x128xf32> to vector<8x128xf32>
    %43 = arith.cmpf ogt, %42, %38 : vector<8x128xf32>
    %44 = arith.select %43, %42, %38 : vector<8x128xi1>, vector<8x128xf32>
    %cst_24 = arith.constant 6.500000e-01 : f32
    %45 = vector.broadcast %cst_24 : f32 to vector<8x128xf32>
    %46 = arith.select %43, %45, %40 : vector<8x128xi1>, vector<8x128xf32>
    %c8 = arith.constant 8 : index
    %c0_25 = arith.constant 0 : index
    %c0_26 = arith.constant 0 : index
    %47 = vector.load %arg1[%c8, %c0_25, %c0_26] : memref<11x8x128xf32, #tpu.memory_space<vmem>>, vector<1x8x128xf32>
    %48 = vector.shape_cast %47 : vector<1x8x128xf32> to vector<8x128xf32>
    %49 = arith.cmpf ogt, %48, %44 : vector<8x128xf32>
    %50 = arith.select %49, %48, %44 : vector<8x128xi1>, vector<8x128xf32>
    %cst_27 = arith.constant 7.500000e-01 : f32
    %51 = vector.broadcast %cst_27 : f32 to vector<8x128xf32>
    %52 = arith.select %49, %51, %46 : vector<8x128xi1>, vector<8x128xf32>
    %c9 = arith.constant 9 : index
    %c0_28 = arith.constant 0 : index
    %c0_29 = arith.constant 0 : index
    %53 = vector.load %arg1[%c9, %c0_28, %c0_29] : memref<11x8x128xf32, #tpu.memory_space<vmem>>, vector<1x8x128xf32>
    %54 = vector.shape_cast %53 : vector<1x8x128xf32> to vector<8x128xf32>
    %55 = arith.cmpf ogt, %54, %50 : vector<8x128xf32>
    %56 = arith.select %55, %54, %50 : vector<8x128xi1>, vector<8x128xf32>
    %cst_30 = arith.constant 8.500000e-01 : f32
    %57 = vector.broadcast %cst_30 : f32 to vector<8x128xf32>
    %58 = arith.select %55, %57, %52 : vector<8x128xi1>, vector<8x128xf32>
    %c10 = arith.constant 10 : index
    %c0_31 = arith.constant 0 : index
    %c0_32 = arith.constant 0 : index
    %59 = vector.load %arg1[%c10, %c0_31, %c0_32] : memref<11x8x128xf32, #tpu.memory_space<vmem>>, vector<1x8x128xf32>
    %60 = vector.shape_cast %59 : vector<1x8x128xf32> to vector<8x128xf32>
    %61 = arith.cmpf ogt, %60, %56 : vector<8x128xf32>
    %cst_33 = arith.constant 0.949999988 : f32
    %62 = vector.broadcast %cst_33 : f32 to vector<8x128xf32>
    %63 = arith.select %61, %62, %58 : vector<8x128xi1>, vector<8x128xf32>
    %64 = arith.addf %7, %63 : vector<8x128xf32>
    %cst_34 = arith.constant 0.000000e+00 : f32
    %cst_35 = arith.constant 1.000000e+00 : f32
    %65 = vector.broadcast %cst_34 : f32 to vector<8x128xf32>
    %66 = arith.maximumf %65, %64 : vector<8x128xf32>
    %67 = vector.broadcast %cst_35 : f32 to vector<8x128xf32>
    %68 = arith.minimumf %67, %66 : vector<8x128xf32>
    %c0_36 = arith.constant 0 : index
    %c0_37 = arith.constant 0 : index
    %69 = vector.load %arg2[%c0_36, %c0_37] : memref<8x128xf32, #tpu.memory_space<vmem>>, vector<8x128xf32>
    tpu.vector_store %arg2[%c0_36, %c0_37], %68 {strides = array<i32>} : memref<8x128xf32, #tpu.memory_space<vmem>>, vector<8x128xf32>,
    return
  }
  func.func @transform_0(%arg0: i32) -> (i32, i32, i32) {
    %c0_i32 = arith.constant 0 : i32
    %c0_i32_0 = arith.constant 0 : i32
    %c0_i32_1 = arith.constant 0 : i32
    return %c0_i32, %arg0, %c0_i32_0 : i32, i32, i32
  }
  func.func @transform_1(%arg0: i32) -> (i32, i32) {
    %c0_i32 = arith.constant 0 : i32
    %c0_i32_0 = arith.constant 0 : i32
    return %arg0, %c0_i32 : i32, i32
  }
}

</mosaic_0001>

<llo_original>
// kernel: tpu_custom_call.1
$region0: #{tpu_custom_call.1}
  #allocation0 [shape = 'u32[]', space=smem, size = 0x4, offset = 0x4, fixed_abs, tag = 'smem constant byte address 0x4 - core index']
  #allocation1 [shape = 'u32[144,128]{1,0:T(1,128)}', space=vmem, size = 0x12000, scoped, tag = 'internal scratch']
  %s0 = inlined_call_operand.hbm [shape: f32[11,8,128], index: 0, kind: input, shape index: {}]
  %s1 = inlined_call_operand.hbm [shape: f32[8,128], index: 1, kind: output, shape index: {}]
  %s2 = sld [smem:[#allocation0]]
  $region18: #{tpu_custom_call.1} parent=0
    _
  %s4 = ssub.s32 1, %s2
  %s5 = scalar_select 0, %s4, %s2
  $region1: #{tpu_custom_call.1} parent=0
    #allocation2 [shape = 'u8[45056]{0}', space=vmem, size = 0xb000, scoped, tag = 'input window, operand 0, single buffered']
    #allocation3 [shape = 's32[1]{0}', space=sflag, size = 0x4, scoped, tag = 'scoped memory for tpu_custom_call.1']
    #allocation4 [shape = 's32[1]{0}', space=sflag, size = 0x4, scoped, tag = 'scoped memory for tpu_custom_call.1']
    #allocation5 [shape = 'u8[4096]{0}', space=vmem, size = 0x1000, scoped, tag = 'output window, operand 0, single buffered']
    %6 = vsyncpa [#allocation3], 0
    %7 = vsyncpa [#allocation4], 0
    // Predicated region
    $region2: #{tpu_custom_call.1} parent=1 // pred_check
      _
    $region3: #{tpu_custom_call.1} parent=1 // pred_check_branch
      %9 = sbr.rel (0) target = $region5
    $region4: #{tpu_custom_call.1} parent=1 // pred_region
      %s11 = ssub.s32 1408, 1408
      %12 = vsyncadd [#allocation3], %s11
      %s13 = sshll.u32 [#allocation2], 4
      %s14 = int_to_ptr.vmem [resolvable:$true] %s13
      %19 = dma.hbm_to_vmem [thread:$0]  %s0, 1408, %s14, [#allocation3], 128, 128, 8
    $region5: #{tpu_custom_call.1} parent=1 // pred_fallthru
      _
    // Predicated region
    $region6: #{tpu_custom_call.1} parent=1 // pred_check
      _
    $region7: #{tpu_custom_call.1} parent=1 // pred_check_branch
      %21 = sbr.rel (0) target = $region9
    $region8: #{tpu_custom_call.1} parent=1 // pred_region
      %22 = dma.done [#allocation3], 1408
    $region9: #{tpu_custom_call.1} parent=1 // pred_fallthru
      _
    %v23 = vld [vmem:[#allocation2] sm:$0xff]
    %v24 = vmul.f32 %v23, 2.0
    %v25 = vsub.f32 %v24, 1.0
    %v26 = vmul.f32 %v25, 0.1
    %s27 = scalar_lea.vmem [#allocation2], 8
    %v28 = vld [vmem:[%s27] sm:$0xff]
    %s29 = scalar_lea.vmem [#allocation2], 16
    %v30 = vld [vmem:[%s29] sm:$0xff]
    %vm31 = vcmp.gt.f32.partialorder %v30, %v28
    %v32 = vsel %vm31, %v30, %v28
    %v33 = vsel %vm31, 0.15, 0.05
    %s34 = scalar_lea.vmem [#allocation2], 24
    %v35 = vld [vmem:[%s34] sm:$0xff]
    %vm36 = vcmp.gt.f32.partialorder %v35, %v32
    %v37 = vsel %vm36, %v35, %v32
    %v38 = vsel %vm36, 0.25, %v33
    %s39 = scalar_lea.vmem [#allocation2], 32
    %v40 = vld [vmem:[%s39] sm:$0xff]
    %vm41 = vcmp.gt.f32.partialorder %v40, %v37
    %v42 = vsel %vm41, %v40, %v37
    %v43 = vsel %vm41, 0.35, %v38
    %s44 = scalar_lea.vmem [#allocation2], 40
    %v45 = vld [vmem:[%s44] sm:$0xff]
    %vm46 = vcmp.gt.f32.partialorder %v45, %v42
    %v47 = vsel %vm46, %v45, %v42
    %v48 = vsel %vm46, 0.45, %v43
    %s49 = scalar_lea.vmem [#allocation2], 48
    %v50 = vld [vmem:[%s49] sm:$0xff]
    %vm51 = vcmp.gt.f32.partialorder %v50, %v47
    %v52 = vsel %vm51, %v50, %v47
    %v53 = vsel %vm51, 0.55, %v48
    %s54 = scalar_lea.vmem [#allocation2], 56
    %v55 = vld [vmem:[%s54] sm:$0xff]
    %vm56 = vcmp.gt.f32.partialorder %v55, %v52
    %v57 = vsel %vm56, %v55, %v52
    %v58 = vsel %vm56, 0.65, %v53
    %s59 = scalar_lea.vmem [#allocation2], 64
    %v60 = vld [vmem:[%s59] sm:$0xff]
    %vm61 = vcmp.gt.f32.partialorder %v60, %v57
    %v62 = vsel %vm61, %v60, %v57
    %v63 = vsel %vm61, 0.75, %v58
    %s64 = scalar_lea.vmem [#allocation2], 72
    %v65 = vld [vmem:[%s64] sm:$0xff]
    %vm66 = vcmp.gt.f32.partialorder %v65, %v62
    %v67 = vsel %vm66, %v65, %v62
    %v68 = vsel %vm66, 0.85, %v63
    %s69 = scalar_lea.vmem [#allocation2], 80
    %v70 = vld [vmem:[%s69] sm:$0xff]
    %vm71 = vcmp.gt.f32.partialorder %v70, %v67
    %v72 = vsel %vm71, 0.95, %v68
    %v73 = vadd.f32 %v26, %v72
    %v74 = vmax.f32 %v73, 0.0
    %v75 = vmin.f32 %v74, 1.0
    %76 = vst [vmem:[#allocation5] sm:$0xff] %v75
    // Predicated region
    $region10: #{tpu_custom_call.1} parent=1 // pred_check
      _
    $region11: #{tpu_custom_call.1} parent=1 // pred_check_branch
      %78 = sbr.rel (0) target = $region13
    $region12: #{tpu_custom_call.1} parent=1 // pred_region
      %s80 = ssub.s32 128, 128
      %81 = vsyncadd [#allocation4], %s80
      %s83 = sshll.u32 [#allocation5], 4
      %s84 = int_to_ptr.vmem [resolvable:$true] %s83
      %86 = dma.vmem_to_hbm [thread:$0]  %s84, 128, %s1, [#allocation4]
    $region13: #{tpu_custom_call.1} parent=1 // pred_fallthru
      _
    // Predicated region
    $region14: #{tpu_custom_call.1} parent=1 // pred_check
      _
    $region15: #{tpu_custom_call.1} parent=1 // pred_check_branch
      %88 = sbr.rel (0) target = $region17
    $region16: #{tpu_custom_call.1} parent=1 // pred_region
      %89 = dma.done [#allocation4], 128
    $region17: #{tpu_custom_call.1} parent=1 // pred_fallthru
      _
    %90 = vsyncpa [#allocation3], 1
    %91 = vsyncpa [#allocation4], 1

</llo_original>
